<compile_context>
chip_gen: v7x
topology: tpu7x:2x2x1
jax: 0.10.0
libtpu: 0.0.40
codegen_flags: <defaults>
</compile_context>

<pallas_src>
import math

import jax
import jax.numpy as jnp
from jax.experimental import pallas as pl
from jax.experimental.pallas import tpu as pltpu


def _pick_q_tile(S, max_tile=512):
    """Query-tile size: full S if small, else the largest mult-of-8 divisor."""
    if S <= max_tile:
        return S
    for t in range(max_tile, 7, -1):
        if t % 8 == 0 and S % t == 0:
            return t
    return S  # no good divisor: fall back to full-S (correct, more VMEM)


def _pick_batch_tile(B, S, max_rows=1024):
    """Batch elements per grid step (only used when not query-tiling)."""
    if S % 8 != 0:
        return 1
    for t in range(B, 0, -1):
        if B % t == 0 and t * S <= max_rows:
            return t
    return 1


def _make_kernel(TB, TQ, S, F, DK):
    nq = S // TQ
    inv_sqrt_dk = 1.0 / math.sqrt(DK)

    def kernel(x_ref, wqkv_ref, o_ref, qkv_ref):
        qi = pl.program_id(1)

        # Fused QKV projection, computed once per batch tile and kept in VMEM
        # scratch for all query tiles of this batch tile.
        @pl.when(qi == 0)
        def _():
            x2d = x_ref[...].reshape(TB * S, F)
            qkv = jnp.dot(x2d, wqkv_ref[...], preferred_element_type=jnp.float32)
            qkv_ref[...] = qkv.reshape(TB, S, 3 * DK)

        if nq == 1:
            q = qkv_ref[:, :, 0:DK]
        else:
            qstart = pl.multiple_of(qi * TQ, TQ)
            q = qkv_ref[:, pl.ds(qstart, TQ), 0:DK]
        k = qkv_ref[:, :, DK:2 * DK]
        v = qkv_ref[:, :, 2 * DK:3 * DK]

        s = jnp.einsum("bqd,bkd->bqk", q, k,
                       preferred_element_type=jnp.float32) * inv_sqrt_dk
        m = jnp.max(s, axis=-1, keepdims=True)
        p = jnp.exp(s - m)
        denom = jnp.sum(p, axis=-1, keepdims=True)
        p = p * pl.reciprocal(denom, approx=True)

        o_ref[...] = jnp.einsum("bqk,bkd->bqd", p, v,
                                preferred_element_type=jnp.float32)

    return kernel


def single_attention(x, wq, wk, wv):
    """x: (B, S, F) f32; wq/wk/wv: (F, d_k) f32 -> (B, S, d_k) f32."""
    B, S, F = x.shape
    DK = wq.shape[1]
    wqkv = jnp.concatenate([wq, wk, wv], axis=1)  # (F, 3*d_k), one-time fuse

    TQ = _pick_q_tile(S)
    nq = S // TQ
    TB = _pick_batch_tile(B, S) if nq == 1 else 1

    kernel = _make_kernel(TB, TQ, S, F, DK)

    return pl.pallas_call(
        kernel,
        out_shape=jax.ShapeDtypeStruct((B, S, DK), jnp.float32),
        grid_spec=pltpu.PrefetchScalarGridSpec(
            num_scalar_prefetch=0,
            grid=(B // TB, nq),
            in_specs=[
                pl.BlockSpec((TB, S, F), lambda bi, qi: (bi, 0, 0)),
                pl.BlockSpec((F, 3 * DK), lambda bi, qi: (0, 0)),
            ],
            out_specs=pl.BlockSpec((TB, TQ, DK), lambda bi, qi: (bi, qi, 0)),
            scratch_shapes=[pltpu.VMEM((TB, S, 3 * DK), jnp.float32)],
        ),
        compiler_params=pltpu.CompilerParams(
            dimension_semantics=("parallel", "arbitrary"),
            vmem_limit_bytes=64 * 1024 * 1024,
        ),
    )(x, wqkv)


def reference(x, wq, wk, wv):
    """Plain-JAX reference mirroring the PyTorch SingleAttention.forward."""
    q = x @ wq
    k = x @ wk
    v = x @ wv
    s = jnp.einsum("bqd,bkd->bqk", q, k) / math.sqrt(wq.shape[1])
    p = jax.nn.softmax(s, axis=-1)
    return jnp.einsum("bqk,bkd->bqd", p, v)


if __name__ == "__main__":
    key = jax.random.PRNGKey(0)
    kx, kq, kk, kv = jax.random.split(key, 4)

    B, S, F, DK = 2, 8, 155, 128
    x = jax.random.normal(kx, (B, S, F), jnp.float32)
    scale = 1.0 / math.sqrt(F)
    wq = scale * jax.random.normal(kq, (F, DK), jnp.float32)
    wk = scale * jax.random.normal(kk, (F, DK), jnp.float32)
    wv = scale * jax.random.normal(kv, (F, DK), jnp.float32)

    out = single_attention(x, wq, wk, wv)
    out = jax.block_until_ready(out)
    assert out.shape == (B, S, DK), out.shape

    ref = reference(x, wq, wk, wv)
    if not jnp.allclose(out, ref, atol=2e-2, rtol=2e-2):
        max_err = float(jnp.max(jnp.abs(out - ref)))
        raise AssertionError(f"Pallas output mismatch, max abs err = {max_err}")

    print("KERNEL_OK")
</pallas_src>

<mosaic_0001>
module attributes {stable_mosaic.version = 11 : i64} {
  func.func @kernel(%arg0: i32, %arg1: i32, %arg2: memref<2x8x155xf32, #tpu.memory_space<vmem>>, %arg3: memref<155x384xf32, #tpu.memory_space<vmem>>, %arg4: memref<2x8x128xf32, #tpu.memory_space<vmem>>, %arg5: memref<2x8x384xf32, #tpu.memory_space<vmem>>) attributes {dimension_semantics = [#tpu.dimension_semantics<parallel>, #tpu.dimension_semantics<arbitrary>], iteration_bounds = array<i64: 1, 1>, scalar_prefetch = 0 : i64, scratch_operands = 1 : i64, tpu.core_type = #tpu.core_type<tc>, window_params = [{transform_indices = @transform_0, window_bounds = array<i64: 2, 8, 155>}, {pipeline_mode = #tpu.pipeline_mode<synchronous>, transform_indices = @transform_1, window_bounds = array<i64: 155, 384>}, {transform_indices = @transform_2, window_bounds = array<i64: 2, 8, 128>}]} {
    %c0_i32 = arith.constant 0 : i32
    %0 = arith.cmpi eq, %arg1, %c0_i32 : i32
    %1 = arith.extui %0 : i1 to i32
    %c0_i32_0 = arith.constant 0 : i32
    %2 = arith.cmpi ne, %1, %c0_i32_0 : i32
    scf.if %2 {
      %c0_14 = arith.constant 0 : index
      %c0_15 = arith.constant 0 : index
      %c0_16 = arith.constant 0 : index
      %21 = vector.load %arg2[%c0_14, %c0_15, %c0_16] : memref<2x8x155xf32, #tpu.memory_space<vmem>>, vector<2x8x155xf32>
      %22 = vector.shape_cast %21 : vector<2x8x155xf32> to vector<16x155xf32>
      %c0_17 = arith.constant 0 : index
      %c0_18 = arith.constant 0 : index
      %23 = vector.load %arg3[%c0_17, %c0_18] : memref<155x384xf32, #tpu.memory_space<vmem>>, vector<155x384xf32>
      %cst_19 = arith.constant dense<0.000000e+00> : vector<16x384xf32>
      %24 = tpu.matmul %22, %23, %cst_19 {dimension_numbers = #tpu.dot_dimension_numbers<[1], [0], [0], [1], [0, 0, 1, 1], [], []>} : vector<16x155xf32>, vector<155x384xf32>, vector<16x384xf32> -> vector<16x384xf32>
      %25 = vector.shape_cast %24 : vector<16x384xf32> to vector<2x8x384xf32>
      %c0_20 = arith.constant 0 : index
      %c0_21 = arith.constant 0 : index
      %c0_22 = arith.constant 0 : index
      %26 = vector.load %arg5[%c0_20, %c0_21, %c0_22] : memref<2x8x384xf32, #tpu.memory_space<vmem>>, vector<2x8x384xf32>
      tpu.vector_store %arg5[%c0_20, %c0_21, %c0_22], %25 {strides = array<i32>} : memref<2x8x384xf32, #tpu.memory_space<vmem>>, vector<2x8x384xf32>,
    } else {
    }
    %c0 = arith.constant 0 : index
    %c0_1 = arith.constant 0 : index
    %c0_2 = arith.constant 0 : index
    %3 = vector.load %arg5[%c0, %c0_1, %c0_2] : memref<2x8x384xf32, #tpu.memory_space<vmem>>, vector<2x8x128xf32>
    %c0_3 = arith.constant 0 : index
    %c0_4 = arith.constant 0 : index
    %c128 = arith.constant 128 : index
    %4 = vector.load %arg5[%c0_3, %c0_4, %c128] : memref<2x8x384xf32, #tpu.memory_space<vmem>>, vector<2x8x128xf32>
    %c0_5 = arith.constant 0 : index
    %c0_6 = arith.constant 0 : index
    %c256 = arith.constant 256 : index
    %5 = vector.load %arg5[%c0_5, %c0_6, %c256] : memref<2x8x384xf32, #tpu.memory_space<vmem>>, vector<2x8x128xf32>
    "tpu.trace_start"() <{level = 10 : i32, message = "bqd,bkd->bqk"}> : () -> ()
    %cst = arith.constant dense<0.000000e+00> : vector<2x8x8xf32>
    %6 = tpu.matmul %3, %4, %cst {dimension_numbers = #tpu.dot_dimension_numbers<[2], [2], [1], [1], [0, 0, 0, 1, 1, 1], [0], [0]>} : vector<2x8x128xf32>, vector<2x8x128xf32>, vector<2x8x8xf32> -> vector<2x8x8xf32>
    "tpu.trace_stop"() : () -> ()
    %cst_7 = arith.constant 0.0883883461 : f32
    %7 = vector.broadcast %cst_7 : f32 to vector<2x8x8xf32>
    %8 = arith.mulf %6, %7 : vector<2x8x8xf32>
    %cst_8 = arith.constant dense<0xFF800000> : vector<2x8xf32>
    %9 = vector.multi_reduction <maximumf>, %8, %cst_8 [2] : vector<2x8x8xf32> to vector<2x8xf32>
    %10 = vector.shape_cast %9 : vector<2x8xf32> to vector<2x8x1xf32>
    %11 = vector.broadcast %10 : vector<2x8x1xf32> to vector<2x8x8xf32>
    %12 = arith.subf %8, %11 : vector<2x8x8xf32>
    %13 = math.exp %12 : vector<2x8x8xf32>
    %cst_9 = arith.constant dense<0.000000e+00> : vector<2x8xf32>
    %14 = vector.multi_reduction <add>, %13, %cst_9 [2] : vector<2x8x8xf32> to vector<2x8xf32>
    %15 = vector.shape_cast %14 : vector<2x8xf32> to vector<2x8x1xf32>
    %16 = tpu.reciprocal %15 {approx = true} : vector<2x8x1xf32> -> vector<2x8x1xf32>
    %17 = vector.broadcast %16 : vector<2x8x1xf32> to vector<2x8x8xf32>
    %18 = arith.mulf %13, %17 : vector<2x8x8xf32>
    "tpu.trace_start"() <{level = 10 : i32, message = "bqk,bkd->bqd"}> : () -> ()
    %cst_10 = arith.constant dense<0.000000e+00> : vector<2x8x128xf32>
    %19 = tpu.matmul %18, %5, %cst_10 {dimension_numbers = #tpu.dot_dimension_numbers<[2], [1], [1], [2], [0, 0, 0, 1, 1, 2], [0], [0]>} : vector<2x8x8xf32>, vector<2x8x128xf32>, vector<2x8x128xf32> -> vector<2x8x128xf32>
    "tpu.trace_stop"() : () -> ()
    %c0_11 = arith.constant 0 : index
    %c0_12 = arith.constant 0 : index
    %c0_13 = arith.constant 0 : index
    %20 = vector.load %arg4[%c0_11, %c0_12, %c0_13] : memref<2x8x128xf32, #tpu.memory_space<vmem>>, vector<2x8x128xf32>
    tpu.vector_store %arg4[%c0_11, %c0_12, %c0_13], %19 {strides = array<i32>} : memref<2x8x128xf32, #tpu.memory_space<vmem>>, vector<2x8x128xf32>,
    return
  }
  func.func @transform_0(%arg0: i32, %arg1: i32) -> (i32, i32, i32) {
    %c0_i32 = arith.constant 0 : i32
    %c0_i32_0 = arith.constant 0 : i32
    %c0_i32_1 = arith.constant 0 : i32
    return %arg0, %c0_i32, %c0_i32_0 : i32, i32, i32
  }
  func.func @transform_1(%arg0: i32, %arg1: i32) -> (i32, i32) {
    %c0_i32 = arith.constant 0 : i32
    %c0_i32_0 = arith.constant 0 : i32
    %c0_i32_1 = arith.constant 0 : i32
    return %c0_i32, %c0_i32_0 : i32, i32
  }
  func.func @transform_2(%arg0: i32, %arg1: i32) -> (i32, i32, i32) {
    %c0_i32 = arith.constant 0 : i32
    %c0_i32_0 = arith.constant 0 : i32
    return %arg0, %arg1, %c0_i32 : i32, i32, i32
  }
}

</mosaic_0001>

<llo_original>
// kernel: tpu_custom_call.1
$region0: #{tpu_custom_call.1}
  #allocation0 [shape = 'u32[]', space=smem, size = 0x4, offset = 0x4, fixed_abs, tag = 'smem constant byte address 0x4 - core index']
  #allocation1 [shape = 'u32[144,128]{1,0:T(1,128)}', space=vmem, size = 0x12000, scoped, tag = 'internal scratch']
  #allocation2 [shape = 'f32[2,8,384]{2,1,0:T(8,128)}', space=vmem, size = 0x6000, scoped, tag = 'scratch operand']
  %s0 = inlined_call_operand.hbm [shape: f32[2,8,155], index: 0, kind: input, shape index: {}]
  %s1 = inlined_call_operand.hbm [shape: f32[155,384], index: 1, kind: input, shape index: {}]
  %s2 = inlined_call_operand.hbm [shape: f32[2,8,128], index: 2, kind: output, shape index: {}]
  %s3 = sld [smem:[#allocation0]]
  $region30: #{tpu_custom_call.1} parent=0
    _
  %s5 = ssub.s32 1, %s3
  %s6 = scalar_select 0, %s5, %s3
  $region1: #{tpu_custom_call.1} parent=0
    #allocation3 [shape = 'u8[16384]{0}', space=vmem, size = 0x4000, scoped, tag = 'input window, operand 0, single buffered']
    #allocation4 [shape = 's32[1]{0}', space=sflag, size = 0x4, scoped, tag = 'scoped memory for tpu_custom_call.1']
    #allocation5 [shape = 's32[1]{0}', space=sflag, size = 0x4, scoped, tag = 'scoped memory for tpu_custom_call.1']
    #allocation6 [shape = 'u8[245760]{0}', space=vmem, size = 0x3c000, scoped, tag = 'input window, operand 1, single buffered']
    #allocation7 [shape = 's32[1]{0}', space=sflag, size = 0x4, scoped, tag = 'scoped memory for tpu_custom_call.1']
    #allocation8 [shape = 'u8[8192]{0}', space=vmem, size = 0x2000, scoped, tag = 'output window, operand 0, single buffered']
    %7 = vsyncpa [#allocation4], 0
    %8 = vsyncpa [#allocation7], 0
    %9 = vsyncpa [#allocation5], 0
    // Predicated region
    $region2: #{tpu_custom_call.1} parent=1 // pred_check
      _
    $region3: #{tpu_custom_call.1} parent=1 // pred_check_branch
      %11 = sbr.rel (0) target = $region5
    $region4: #{tpu_custom_call.1} parent=1 // pred_region
      %s13 = ssub.s32 512, 512
      %14 = vsyncadd [#allocation4], %s13
      %s15 = sshll.u32 [#allocation3], 4
      %s16 = int_to_ptr.vmem [resolvable:$true] %s15
      %21 = dma.hbm_to_vmem [thread:$0]  %s0, 512, %s16, [#allocation4], 256, 256, 16
    $region5: #{tpu_custom_call.1} parent=1 // pred_fallthru
      _
    // Predicated region
    $region6: #{tpu_custom_call.1} parent=1 // pred_check
      _
    $region7: #{tpu_custom_call.1} parent=1 // pred_check_branch
      %23 = sbr.rel (0) target = $region9
    $region8: #{tpu_custom_call.1} parent=1 // pred_region
      %s25 = ssub.s32 7680, 7680
      %26 = vsyncadd [#allocation7], %s25
      %s27 = sshll.u32 [#allocation6], 4
      %s28 = int_to_ptr.vmem [resolvable:$true] %s27
      %33 = dma.hbm_to_vmem [thread:$0]  %s1, 7680, %s28, [#allocation7], 384, 384, 24
    $region9: #{tpu_custom_call.1} parent=1 // pred_fallthru
      _
    // Predicated region
    $region10: #{tpu_custom_call.1} parent=1 // pred_check
      _
    $region11: #{tpu_custom_call.1} parent=1 // pred_check_branch
      %35 = sbr.rel (0) target = $region13
    $region12: #{tpu_custom_call.1} parent=1 // pred_region
      %36 = dma.done [#allocation4], 512
    $region13: #{tpu_custom_call.1} parent=1 // pred_fallthru
      _
    // Predicated region
    $region14: #{tpu_custom_call.1} parent=1 // pred_check
      _
    $region15: #{tpu_custom_call.1} parent=1 // pred_check_branch
      %38 = sbr.rel (0) target = $region17
    $region16: #{tpu_custom_call.1} parent=1 // pred_region
      %39 = dma.done [#allocation7], 7680
    $region17: #{tpu_custom_call.1} parent=1 // pred_fallthru
      _
    %p40 = scmp.eq.s32.totalorder 0, 0
    // Predicated region
    $region18: #{tpu_custom_call.1} parent=1 // pred_check
      %p41 = pneg %p40
    $region19: #{tpu_custom_call.1} parent=1 // pred_check_branch
      %43 = sbr.rel (%p41) target = $region21
    $region20: #{tpu_custom_call.1} parent=1 // pred_region
      %v44 = vld [vmem:[#allocation3] sm:$0xff]
      %v45 = vld [vmem:[#allocation3 + $0x8] sm:$0xff]
      %v46 = vld [vmem:[#allocation3 + $0x10] sm:$0xff]
      %v47 = vld [vmem:[#allocation3 + $0x18] sm:$0xff]
      %v48 = vld [vmem:[#allocation6] sm:$0xff]
      %v49 = vld [vmem:[#allocation6 + $0x8] sm:$0xff]
      %v50 = vld [vmem:[#allocation6 + $0x10] sm:$0xff]
      %v51 = vld [vmem:[#allocation6 + $0x18] sm:$0xff]
      %v52 = vld [vmem:[#allocation6 + $0x20] sm:$0xff]
      %v53 = vld [vmem:[#allocation6 + $0x28] sm:$0xff]
      %v54 = vld [vmem:[#allocation6 + $0x30] sm:$0xff]
      %v55 = vld [vmem:[#allocation6 + $0x38] sm:$0xff]
      %v56 = vld [vmem:[#allocation6 + $0x40] sm:$0xff]
      %v57 = vld [vmem:[#allocation6 + $0x48] sm:$0xff]
      %v58 = vld [vmem:[#allocation6 + $0x50] sm:$0xff]
      %v59 = vld [vmem:[#allocation6 + $0x58] sm:$0xff]
      %v60 = vld [vmem:[#allocation6 + $0x60] sm:$0xff]
      %v61 = vld [vmem:[#allocation6 + $0x68] sm:$0xff]
      %v62 = vld [vmem:[#allocation6 + $0x70] sm:$0xff]
      %v63 = vld [vmem:[#allocation6 + $0x78] sm:$0xff]
      %v64 = vld [vmem:[#allocation6 + $0x80] sm:$0xff]
      %v65 = vld [vmem:[#allocation6 + $0x88] sm:$0xff]
      %v66 = vld [vmem:[#allocation6 + $0x90] sm:$0xff]
      %v67 = vld [vmem:[#allocation6 + $0x98] sm:$0xff]
      %v68 = vld [vmem:[#allocation6 + $0xa0] sm:$0xff]
      %v69 = vld [vmem:[#allocation6 + $0xa8] sm:$0xff]
      %v70 = vld [vmem:[#allocation6 + $0xb0] sm:$0xff]
      %v71 = vld [vmem:[#allocation6 + $0xb8] sm:$0xff]
      %v72 = vld [vmem:[#allocation6 + $0xc0] sm:$0xff]
      %v73 = vld [vmem:[#allocation6 + $0xc8] sm:$0xff]
      %v74 = vld [vmem:[#allocation6 + $0xd0] sm:$0xff]
      %v75 = vld [vmem:[#allocation6 + $0xd8] sm:$0xff]
      %v76 = vld [vmem:[#allocation6 + $0xe0] sm:$0xff]
      %v77 = vld [vmem:[#allocation6 + $0xe8] sm:$0xff]
      %v78 = vld [vmem:[#allocation6 + $0xf0] sm:$0xff]
      %v79 = vld [vmem:[#allocation6 + $0xf8] sm:$0xff]
      %v80 = vld [vmem:[#allocation6 + $0x100] sm:$0xff]
      %v81 = vld [vmem:[#allocation6 + $0x108] sm:$0xff]
      %v82 = vld [vmem:[#allocation6 + $0x110] sm:$0xff]
      %v83 = vld [vmem:[#allocation6 + $0x118] sm:$0xff]
      %v84 = vld [vmem:[#allocation6 + $0x120] sm:$0xff]
      %v85 = vld [vmem:[#allocation6 + $0x128] sm:$0xff]
      %v86 = vld [vmem:[#allocation6 + $0x130] sm:$0xff]
      %v87 = vld [vmem:[#allocation6 + $0x138] sm:$0xff]
      %v88 = vld [vmem:[#allocation6 + $0x140] sm:$0xff]
      %v89 = vld [vmem:[#allocation6 + $0x148] sm:$0xff]
      %v90 = vld [vmem:[#allocation6 + $0x150] sm:$0xff]
      %v91 = vld [vmem:[#allocation6 + $0x158] sm:$0xff]
      %v92 = vld [vmem:[#allocation6 + $0x160] sm:$0xff]
      %v93 = vld [vmem:[#allocation6 + $0x168] sm:$0xff]
      %v94 = vld [vmem:[#allocation6 + $0x170] sm:$0xff]
      %v95 = vld [vmem:[#allocation6 + $0x178] sm:$0xff]
      %v96 = vld [vmem:[#allocation6 + $0x180] sm:$0xff]
      %v97 = vld [vmem:[#allocation6 + $0x188] sm:$0xff]
      %v98 = vld [vmem:[#allocation6 + $0x190] sm:$0xff]
      %v99 = vld [vmem:[#allocation6 + $0x198] sm:$0xff]
      %v100 = vld [vmem:[#allocation6 + $0x1a0] sm:$0xff]
      %v101 = vld [vmem:[#allocation6 + $0x1a8] sm:$0xff]
      %v102 = vld [vmem:[#allocation6 + $0x1b0] sm:$0xff]
      %v103 = vld [vmem:[#allocation6 + $0x1b8] sm:$0xff]
      %v104 = vld [vmem:[#allocation6 + $0x1c0] sm:$0xff]
      %v105 = vld [vmem:[#allocation6 + $0x1c8] sm:$0x7]
      %v106 = vld [vmem:[#allocation6 + $0x1d0] sm:$0x7]
      %v107 = vld [vmem:[#allocation6 + $0x1d8] sm:$0x7]
      %vm108 = vcmask 220160
      %v110 = vsel %vm108, %v45, 0
      %v113 = vsel %vm108, %v47, 0
      %vm115 = vcmask 1042432
      %v117 = vsel %vm115, %v105, 0
      %v120 = vsel %vm115, %v106, 0
      %v123 = vsel %vm115, %v107, 0
      %125 = vmatprep.subr.mxu0 %v49
      %126 = vmatpush1.msra.mxu0 %v48
      %127 = vmatprep.subr.mxu0 %v52
      %128 = vmatpush1.msra.mxu0 %v51
      %129 = vmatprep.subr.mxu0 %v55
      %130 = vmatpush1.msra.mxu0 %v54
      %131 = vmatprep.subr.mxu0 %v58
      %132 = vmatpush1.msra.mxu0 %v57
      %133 = vmatprep.subr.mxu0 %v61
      %134 = vmatpush1.msra.mxu0 %v60
      %135 = vmatprep.subr.mxu0 %v64
      %136 = vmatpush1.msra.mxu0 %v63
      %137 = vmatprep.subr.mxu0 %v67
      %138 = vmatpush1.msra.mxu0 %v66
      %139 = vmatprep.subr.mxu0 %v70
      %140 = vmatpush1.msra.mxu0 %v69
      %141 = vmatprep.subr.mxu0 %v73
      %142 = vmatpush1.msra.mxu0 %v72
      %143 = vmatprep.subr.mxu0 %v76
      %144 = vmatpush1.msra.mxu0 %v75
      %145 = vmatprep.subr.mxu0 %v79
      %146 = vmatpush1.msra.mxu0 %v78
      %147 = vmatprep.subr.mxu0 %v82
      %148 = vmatpush1.msra.mxu0 %v81
      %149 = vmatprep.subr.mxu0 %v85
      %150 = vmatpush1.msra.mxu0 %v84
      %151 = vmatprep.subr.mxu0 %v88
      %152 = vmatpush1.msra.mxu0 %v87
      %153 = vmatprep.subr.mxu0 %v91
      %154 = vmatpush1.msra.mxu0 %v90
      %155 = vmatprep.subr.mxu0 %v94
      %156 = vmatpush1.msra.mxu0 %v93
      %157 = vmatprep.subr.mxu0 %v97
      %158 = vmatpush1.msra.mxu0 %v96
      %159 = vmatprep.subr.mxu0 %v100
      %160 = vmatpush1.msra.mxu0 %v99
      %161 = vmatprep.subr.mxu0 %v103
      %162 = vmatpush1.msra.mxu0 %v102
      %163 = vmatprep.subr.mxu0 %v120
      %164 = vmatpush1.msra.mxu0 %v117
      %165 = vmatprep.subr.mxu0 0.0
      %166 = vmatpush1.msra.mxu0 0.0
      %167 = vmatprep.subr.mxu0 0.0
      %168 = vmatpush1.msra.mxu0 0.0
      %169 = vmatprep.subr.mxu0 0.0
      %170 = vmatpush1.msra.mxu0 0.0
      %171 = vmatprep.subr.mxu0 0.0
      %172 = vmatpush1.msra.mxu0 0.0
      %173 = vmatprep.subr.mxu0 0.0
      %174 = vmatpush1.msra.mxu0 0.0
      %175 = vmatprep.subr.mxu0 0.0
      %176 = vmatpush1.msra.mxu0 0.0
      %177 = vmatprep.subr.mxu0 0.0
      %178 = vmatpush1.msra.mxu0 0.0
      %179 = vmatprep.subr.mxu0 0.0
      %180 = vmatpush1.msra.mxu0 0.0
      %181 = vmatprep.subr.mxu0 0.0
      %182 = vmatpush1.msra.mxu0 0.0
      %183 = vmatprep.subr.mxu0 0.0
      %184 = vmatpush1.msra.mxu0 0.0
      %185 = vmatprep.subr.mxu0 0.0
      %186 = vmatpush1.msra.mxu0 0.0
      %187 = vmatprep.subr.mxu0 0.0
      %188 = vmatpush1.msra.mxu0 0.0
      %189 = vmatprep.mubr.f32.mxu0 %v110
      %190 = vmatmul.mubr.f32.gmra.mrb[0].mxu0 %v44
      %v191 = vpop.f32.mrb[0].mxu0
      %v192 = vadd.f32 0.0, %v191
      %v193 = vpop.f32.mrb[0].mxu0
      %v194 = vadd.f32 0.0, %v193
      %195 = vmatprep.mubr.f32.mxu0 %v113
      %196 = vmatmul.mubr.f32.gmra.mrb[0].mxu0 %v46
      %v197 = vpop.f32.mrb[0].mxu0
      %v198 = vadd.f32 0.0, %v197
      %v199 = vpop.f32.mrb[0].mxu0
      %v200 = vadd.f32 0.0, %v199
      %201 = vdwg.mxu0
      %202 = vmatprep.subr.mxu0 0.0
      %203 = vmatpush1.msra.mxu0 %v50
      %204 = vmatprep.subr.mxu0 0.0
      %205 = vmatpush1.msra.mxu0 %v53
      %206 = vmatprep.subr.mxu0 0.0
      %207 = vmatpush1.msra.mxu0 %v56
      %208 = vmatprep.subr.mxu0 0.0
      %209 = vmatpush1.msra.mxu0 %v59
      %210 = vmatprep.subr.mxu0 0.0
      %211 = vmatpush1.msra.mxu0 %v62
      %212 = vmatprep.subr.mxu0 0.0
      %213 = vmatpush1.msra.mxu0 %v65
      %214 = vmatprep.subr.mxu0 0.0
      %215 = vmatpush1.msra.mxu0 %v68
      %216 = vmatprep.subr.mxu0 0.0
      %217 = vmatpush1.msra.mxu0 %v71
      %218 = vmatprep.subr.mxu0 0.0
      %219 = vmatpush1.msra.mxu0 %v74
      %220 = vmatprep.subr.mxu0 0.0
      %221 = vmatpush1.msra.mxu0 %v77
      %222 = vmatprep.subr.mxu0 0.0
      %223 = vmatpush1.msra.mxu0 %v80
      %224 = vmatprep.subr.mxu0 0.0
      %225 = vmatpush1.msra.mxu0 %v83
      %226 = vmatprep.subr.mxu0 0.0
      %227 = vmatpush1.msra.mxu0 %v86
      %228 = vmatprep.subr.mxu0 0.0
      %229 = vmatpush1.msra.mxu0 %v89
      %230 = vmatprep.subr.mxu0 0.0
      %231 = vmatpush1.msra.mxu0 %v92
      %232 = vmatprep.subr.mxu0 0.0
      %233 = vmatpush1.msra.mxu0 %v95
      %234 = vmatprep.subr.mxu0 0.0
      %235 = vmatpush1.msra.mxu0 %v98
      %236 = vmatprep.subr.mxu0 0.0
      %237 = vmatpush1.msra.mxu0 %v101
      %238 = vmatprep.subr.mxu0 0.0
      %239 = vmatpush1.msra.mxu0 %v104
      %240 = vmatprep.subr.mxu0 0.0
      %241 = vmatpush1.msra.mxu0 %v123
      %242 = vmatprep.subr.mxu0 0.0
      %243 = vmatpush1.msra.mxu0 0.0
      %244 = vmatprep.subr.mxu0 0.0
      %245 = vmatpush1.msra.mxu0 0.0
      %246 = vmatprep.subr.mxu0 0.0
      %247 = vmatpush1.msra.mxu0 0.0
      %248 = vmatprep.subr.mxu0 0.0
      %249 = vmatpush1.msra.mxu0 0.0
      %250 = vmatprep.subr.mxu0 0.0
      %251 = vmatpush1.msra.mxu0 0.0
      %252 = vmatprep.subr.mxu0 0.0
      %253 = vmatpush1.msra.mxu0 0.0
      %254 = vmatprep.subr.mxu0 0.0
      %255 = vmatpush1.msra.mxu0 0.0
      %256 = vmatprep.subr.mxu0 0.0
      %257 = vmatpush1.msra.mxu0 0.0
      %258 = vmatprep.subr.mxu0 0.0
      %259 = vmatpush1.msra.mxu0 0.0
      %260 = vmatprep.subr.mxu0 0.0
      %261 = vmatpush1.msra.mxu0 0.0
      %262 = vmatprep.subr.mxu0 0.0
      %263 = vmatpush1.msra.mxu0 0.0
      %264 = vmatprep.subr.mxu0 0.0
      %265 = vmatpush1.msra.mxu0 0.0
      %266 = vmatprep.mubr.f32.mxu0 %v110
      %267 = vmatmul.mubr.f32.gmra.mrb[0].mxu0 %v44
      %v268 = vpop.f32.mrb[0].mxu0
      %v269 = vadd.f32 0.0, %v268
      %v270 = vpop.f32.mrb[0].mxu0
      %271 = vmatprep.mubr.f32.mxu0 %v113
      %272 = vmatmul.mubr.f32.gmra.mrb[0].mxu0 %v46
      %v273 = vpop.f32.mrb[0].mxu0
      %v274 = vadd.f32 0.0, %v273
      %v275 = vpop.f32.mrb[0].mxu0
      %276 = vdwg.mxu0
      %277 = vst [vmem:[#allocation2] sm:$0xff] %v192
      %278 = vst [vmem:[#allocation2 + $0x8] sm:$0xff] %v194
      %279 = vst [vmem:[#allocation2 + $0x10] sm:$0xff] %v269
      %280 = vst [vmem:[#allocation2 + $0x18] sm:$0xff] %v198
      %281 = vst [vmem:[#allocation2 + $0x20] sm:$0xff] %v200
      %282 = vst [vmem:[#allocation2 + $0x28] sm:$0xff] %v274
    $region21: #{tpu_custom_call.1} parent=1 // pred_fallthru
      _
    %v283 = vld [vmem:[#allocation2] sm:$0xff]
    %v284 = vld [vmem:[#allocation2 + $0x18] sm:$0xff]
    %v285 = vld [vmem:[#allocation2 + $0x8] sm:$0xff]
    %v286 = vld [vmem:[#allocation2 + $0x20] sm:$0xff]
    %v287 = vld [vmem:[#allocation2 + $0x10] sm:$0xff]
    %v288 = vld [vmem:[#allocation2 + $0x28] sm:$0xff]
    %289 = vmatprep.subr.mxu0 0.0
    %290 = vmatpush1.xpose.msra.mxu0 %v285
    %291 = vmatprep.subr.mxu0 0.0
    %292 = vmatpush1.xpose.msra.mxu0 0.0
    %293 = vmatprep.subr.mxu0 0.0
    %294 = vmatpush1.xpose.msra.mxu0 0.0
    %295 = vmatprep.subr.mxu0 0.0
    %296 = vmatpush1.xpose.msra.mxu0 0.0
    %297 = vmatprep.subr.mxu0 0.0
    %298 = vmatpush1.xpose.msra.mxu0 0.0
    %299 = vmatprep.subr.mxu0 0.0
    %300 = vmatpush1.xpose.msra.mxu0 0.0
    %301 = vmatprep.subr.mxu0 0.0
    %302 = vmatpush1.xpose.msra.mxu0 0.0
    %303 = vmatprep.subr.mxu0 0.0
    %304 = vmatpush1.xpose.msra.mxu0 0.0
    %305 = vmatprep.subr.mxu0 0.0
    %306 = vmatpush1.xpose.msra.mxu0 0.0
    %307 = vmatprep.subr.mxu0 0.0
    %308 = vmatpush1.xpose.msra.mxu0 0.0
    %309 = vmatprep.subr.mxu0 0.0
    %310 = vmatpush1.xpose.msra.mxu0 0.0
    %311 = vmatprep.subr.mxu0 0.0
    %312 = vmatpush1.xpose.msra.mxu0 0.0
    %313 = vmatprep.subr.mxu0 0.0
    %314 = vmatpush1.xpose.msra.mxu0 0.0
    %315 = vmatprep.subr.mxu0 0.0
    %316 = vmatpush1.xpose.msra.mxu0 0.0
    %317 = vmatprep.subr.mxu0 0.0
    %318 = vmatpush1.xpose.msra.mxu0 0.0
    %319 = vmatprep.subr.mxu0 0.0
    %320 = vmatpush1.xpose.msra.mxu0 0.0
    %321 = vmatprep.subr.mxu0 0.0
    %322 = vmatpush1.xpose.msra.mxu0 0.0
    %323 = vmatprep.subr.mxu0 0.0
    %324 = vmatpush1.xpose.msra.mxu0 0.0
    %325 = vmatprep.subr.mxu0 0.0
    %326 = vmatpush1.xpose.msra.mxu0 0.0
    %327 = vmatprep.subr.mxu0 0.0
    %328 = vmatpush1.xpose.msra.mxu0 0.0
    %329 = vmatprep.subr.mxu0 0.0
    %330 = vmatpush1.xpose.msra.mxu0 0.0
    %331 = vmatprep.subr.mxu0 0.0
    %332 = vmatpush1.xpose.msra.mxu0 0.0
    %333 = vmatprep.subr.mxu0 0.0
    %334 = vmatpush1.xpose.msra.mxu0 0.0
    %335 = vmatprep.subr.mxu0 0.0
    %336 = vmatpush1.xpose.msra.mxu0 0.0
    %337 = vmatprep.subr.mxu0 0.0
    %338 = vmatpush1.xpose.msra.mxu0 0.0
    %339 = vmatprep.subr.mxu0 0.0
    %340 = vmatpush1.xpose.msra.mxu0 0.0
    %341 = vmatprep.subr.mxu0 0.0
    %342 = vmatpush1.xpose.msra.mxu0 0.0
    %343 = vmatprep.subr.mxu0 0.0
    %344 = vmatpush1.xpose.msra.mxu0 0.0
    %345 = vmatprep.subr.mxu0 0.0
    %346 = vmatpush1.xpose.msra.mxu0 0.0
    %347 = vmatprep.subr.mxu0 0.0
    %348 = vmatpush1.xpose.msra.mxu0 0.0
    %349 = vmatprep.subr.mxu0 0.0
    %350 = vmatpush1.xpose.msra.mxu0 0.0
    %351 = vmatprep.subr.mxu0 0.0
    %352 = vmatpush1.xpose.msra.mxu0 0.0
    %353 = vmatprep.mubr.f32.mxu0 0.0
    %354 = vmatmul.mubr.f32.gmra.mrb[0].mxu0 %v283
    %v355 = vpop.f32.mrb[0].mxu0
    %v356 = vadd.f32 0.0, %v355
    %v357 = vpop.f32.mrb[0].mxu0
    %358 = vdwg.mxu0
    %359 = vmatprep.subr.mxu0 0.0
    %360 = vmatpush1.xpose.msra.mxu0 %v286
    %361 = vmatprep.subr.mxu0 0.0
    %362 = vmatpush1.xpose.msra.mxu0 0.0
    %363 = vmatprep.subr.mxu0 0.0
    %364 = vmatpush1.xpose.msra.mxu0 0.0
    %365 = vmatprep.subr.mxu0 0.0
    %366 = vmatpush1.xpose.msra.mxu0 0.0
    %367 = vmatprep.subr.mxu0 0.0
    %368 = vmatpush1.xpose.msra.mxu0 0.0
    %369 = vmatprep.subr.mxu0 0.0
    %370 = vmatpush1.xpose.msra.mxu0 0.0
    %371 = vmatprep.subr.mxu0 0.0
    %372 = vmatpush1.xpose.msra.mxu0 0.0
    %373 = vmatprep.subr.mxu0 0.0
    %374 = vmatpush1.xpose.msra.mxu0 0.0
    %375 = vmatprep.subr.mxu0 0.0
    %376 = vmatpush1.xpose.msra.mxu0 0.0
    %377 = vmatprep.subr.mxu0 0.0
    %378 = vmatpush1.xpose.msra.mxu0 0.0
    %379 = vmatprep.subr.mxu0 0.0
    %380 = vmatpush1.xpose.msra.mxu0 0.0
    %381 = vmatprep.subr.mxu0 0.0
    %382 = vmatpush1.xpose.msra.mxu0 0.0
    %383 = vmatprep.subr.mxu0 0.0
    %384 = vmatpush1.xpose.msra.mxu0 0.0
    %385 = vmatprep.subr.mxu0 0.0
    %386 = vmatpush1.xpose.msra.mxu0 0.0
    %387 = vmatprep.subr.mxu0 0.0
    %388 = vmatpush1.xpose.msra.mxu0 0.0
    %389 = vmatprep.subr.mxu0 0.0
    %390 = vmatpush1.xpose.msra.mxu0 0.0
    %391 = vmatprep.subr.mxu0 0.0
    %392 = vmatpush1.xpose.msra.mxu0 0.0
    %393 = vmatprep.subr.mxu0 0.0
    %394 = vmatpush1.xpose.msra.mxu0 0.0
    %395 = vmatprep.subr.mxu0 0.0
    %396 = vmatpush1.xpose.msra.mxu0 0.0
    %397 = vmatprep.subr.mxu0 0.0
    %398 = vmatpush1.xpose.msra.mxu0 0.0
    %399 = vmatprep.subr.mxu0 0.0
    %400 = vmatpush1.xpose.msra.mxu0 0.0
    %401 = vmatprep.subr.mxu0 0.0
    %402 = vmatpush1.xpose.msra.mxu0 0.0
    %403 = vmatprep.subr.mxu0 0.0
    %404 = vmatpush1.xpose.msra.mxu0 0.0
    %405 = vmatprep.subr.mxu0 0.0
    %406 = vmatpush1.xpose.msra.mxu0 0.0
    %407 = vmatprep.subr.mxu0 0.0
    %408 = vmatpush1.xpose.msra.mxu0 0.0
    %409 = vmatprep.subr.mxu0 0.0
    %410 = vmatpush1.xpose.msra.mxu0 0.0
    %411 = vmatprep.subr.mxu0 0.0
    %412 = vmatpush1.xpose.msra.mxu0 0.0
    %413 = vmatprep.subr.mxu0 0.0
    %414 = vmatpush1.xpose.msra.mxu0 0.0
    %415 = vmatprep.subr.mxu0 0.0
    %416 = vmatpush1.xpose.msra.mxu0 0.0
    %417 = vmatprep.subr.mxu0 0.0
    %418 = vmatpush1.xpose.msra.mxu0 0.0
    %419 = vmatprep.subr.mxu0 0.0
    %420 = vmatpush1.xpose.msra.mxu0 0.0
    %421 = vmatprep.subr.mxu0 0.0
    %422 = vmatpush1.xpose.msra.mxu0 0.0
    %423 = vmatprep.mubr.f32.mxu0 0.0
    %424 = vmatmul.mubr.f32.gmra.mrb[0].mxu0 %v284
    %v425 = vpop.f32.mrb[0].mxu0
    %v426 = vadd.f32 0.0, %v425
    %v427 = vpop.f32.mrb[0].mxu0
    %428 = vdwg.mxu0
    %v429 = vmul.f32 %v356, 0.088388346
    %v430 = vmul.f32 %v426, 0.088388346
    %vm431 = vcmask 64512
    %v432 = vsel %vm431, %v429, -inf
    %433 = vmax.xlane.f32.xlu0 %v432
    %v434 = vpop.xlane.xlu0 %433
    %v435 = vsel %vm431, %v430, -inf
    %436 = vmax.xlane.f32.xlu0 %v435
    %v437 = vpop.xlane.xlu0 %436
    %v438 = vsub.f32 %v429, %v434
    %v439 = vsub.f32 %v430, %v437
    %v440 = vmul.f32 %v438, 1.442695
    %v441 = vpow.pop %v440
    %v442 = vmul.f32 %v439, 1.442695
    %v443 = vpow.pop %v442
    %v444 = vsel %vm431, %v441, 0.0
    %445 = vadd.xlane.f32.xlu0 %v444
    %v446 = vpop.xlane.xlu0 %445
    %v447 = vsel %vm431, %v443, 0.0
    %448 = vadd.xlane.f32.xlu0 %v447
    %v449 = vpop.xlane.xlu0 %448
    %v450 = vrcp.pop %v446
    %v451 = vrcp.pop %v449
    %v452 = vmul.f32 %v441, %v450
    %v453 = vmul.f32 %v443, %v451
    %v455 = vsel %vm431, %v452, 0
    %457 = vmatprep.subr.mxu0 0.0
    %458 = vmatpush1.msra.mxu0 %v287
    %459 = vmatprep.subr.mxu0 0.0
    %460 = vmatpush1.msra.mxu0 0.0
    %461 = vmatprep.subr.mxu0 0.0
    %462 = vmatpush1.msra.mxu0 0.0
    %463 = vmatprep.subr.mxu0 0.0
    %464 = vmatpush1.msra.mxu0 0.0
    %465 = vmatprep.subr.mxu0 0.0
    %466 = vmatpush1.msra.mxu0 0.0
    %467 = vmatprep.subr.mxu0 0.0
    %468 = vmatpush1.msra.mxu0 0.0
    %469 = vmatprep.subr.mxu0 0.0
    %470 = vmatpush1.msra.mxu0 0.0
    %471 = vmatprep.subr.mxu0 0.0
    %472 = vmatpush1.msra.mxu0 0.0
    %473 = vmatprep.subr.mxu0 0.0
    %474 = vmatpush1.msra.mxu0 0.0
    %475 = vmatprep.subr.mxu0 0.0
    %476 = vmatpush1.msra.mxu0 0.0
    %477 = vmatprep.subr.mxu0 0.0
    %478 = vmatpush1.msra.mxu0 0.0
    %479 = vmatprep.subr.mxu0 0.0
    %480 = vmatpush1.msra.mxu0 0.0
    %481 = vmatprep.subr.mxu0 0.0
    %482 = vmatpush1.msra.mxu0 0.0
    %483 = vmatprep.subr.mxu0 0.0
    %484 = vmatpush1.msra.mxu0 0.0
    %485 = vmatprep.subr.mxu0 0.0
    %486 = vmatpush1.msra.mxu0 0.0
    %487 = vmatprep.subr.mxu0 0.0
    %488 = vmatpush1.msra.mxu0 0.0
    %489 = vmatprep.subr.mxu0 0.0
    %490 = vmatpush1.msra.mxu0 0.0
    %491 = vmatprep.subr.mxu0 0.0
    %492 = vmatpush1.msra.mxu0 0.0
    %493 = vmatprep.subr.mxu0 0.0
    %494 = vmatpush1.msra.mxu0 0.0
    %495 = vmatprep.subr.mxu0 0.0
    %496 = vmatpush1.msra.mxu0 0.0
    %497 = vmatprep.subr.mxu0 0.0
    %498 = vmatpush1.msra.mxu0 0.0
    %499 = vmatprep.subr.mxu0 0.0
    %500 = vmatpush1.msra.mxu0 0.0
    %501 = vmatprep.subr.mxu0 0.0
    %502 = vmatpush1.msra.mxu0 0.0
    %503 = vmatprep.subr.mxu0 0.0
    %504 = vmatpush1.msra.mxu0 0.0
    %505 = vmatprep.subr.mxu0 0.0
    %506 = vmatpush1.msra.mxu0 0.0
    %507 = vmatprep.subr.mxu0 0.0
    %508 = vmatpush1.msra.mxu0 0.0
    %509 = vmatprep.subr.mxu0 0.0
    %510 = vmatpush1.msra.mxu0 0.0
    %511 = vmatprep.subr.mxu0 0.0
    %512 = vmatpush1.msra.mxu0 0.0
    %513 = vmatprep.subr.mxu0 0.0
    %514 = vmatpush1.msra.mxu0 0.0
    %515 = vmatprep.subr.mxu0 0.0
    %516 = vmatpush1.msra.mxu0 0.0
    %517 = vmatprep.subr.mxu0 0.0
    %518 = vmatpush1.msra.mxu0 0.0
    %519 = vmatprep.subr.mxu0 0.0
    %520 = vmatpush1.msra.mxu0 0.0
    %521 = vmatprep.mubr.f32.mxu0 0.0
    %522 = vmatmul.mubr.f32.gmra.mrb[0].mxu0 %v455
    %v523 = vpop.f32.mrb[0].mxu0
    %v524 = vadd.f32 0.0, %v523
    %v525 = vpop.f32.mrb[0].mxu0
    %526 = vdwg.mxu0
    %v528 = vsel %vm431, %v453, 0
    %530 = vmatprep.subr.mxu0 0.0
    %531 = vmatpush1.msra.mxu0 %v288
    %532 = vmatprep.subr.mxu0 0.0
    %533 = vmatpush1.msra.mxu0 0.0
    %534 = vmatprep.subr.mxu0 0.0
    %535 = vmatpush1.msra.mxu0 0.0
    %536 = vmatprep.subr.mxu0 0.0
    %537 = vmatpush1.msra.mxu0 0.0
    %538 = vmatprep.subr.mxu0 0.0
    %539 = vmatpush1.msra.mxu0 0.0
    %540 = vmatprep.subr.mxu0 0.0
    %541 = vmatpush1.msra.mxu0 0.0
    %542 = vmatprep.subr.mxu0 0.0
    %543 = vmatpush1.msra.mxu0 0.0
    %544 = vmatprep.subr.mxu0 0.0
    %545 = vmatpush1.msra.mxu0 0.0
    %546 = vmatprep.subr.mxu0 0.0
    %547 = vmatpush1.msra.mxu0 0.0
    %548 = vmatprep.subr.mxu0 0.0
    %549 = vmatpush1.msra.mxu0 0.0
    %550 = vmatprep.subr.mxu0 0.0
    %551 = vmatpush1.msra.mxu0 0.0
    %552 = vmatprep.subr.mxu0 0.0
    %553 = vmatpush1.msra.mxu0 0.0
    %554 = vmatprep.subr.mxu0 0.0
    %555 = vmatpush1.msra.mxu0 0.0
    %556 = vmatprep.subr.mxu0 0.0
    %557 = vmatpush1.msra.mxu0 0.0
    %558 = vmatprep.subr.mxu0 0.0
    %559 = vmatpush1.msra.mxu0 0.0
    %560 = vmatprep.subr.mxu0 0.0
    %561 = vmatpush1.msra.mxu0 0.0
    %562 = vmatprep.subr.mxu0 0.0
    %563 = vmatpush1.msra.mxu0 0.0
    %564 = vmatprep.subr.mxu0 0.0
    %565 = vmatpush1.msra.mxu0 0.0
    %566 = vmatprep.subr.mxu0 0.0
    %567 = vmatpush1.msra.mxu0 0.0
    %568 = vmatprep.subr.mxu0 0.0
    %569 = vmatpush1.msra.mxu0 0.0
    %570 = vmatprep.subr.mxu0 0.0
    %571 = vmatpush1.msra.mxu0 0.0
    %572 = vmatprep.subr.mxu0 0.0
    %573 = vmatpush1.msra.mxu0 0.0
    %574 = vmatprep.subr.mxu0 0.0
    %575 = vmatpush1.msra.mxu0 0.0
    %576 = vmatprep.subr.mxu0 0.0
    %577 = vmatpush1.msra.mxu0 0.0
    %578 = vmatprep.subr.mxu0 0.0
    %579 = vmatpush1.msra.mxu0 0.0
    %580 = vmatprep.subr.mxu0 0.0
    %581 = vmatpush1.msra.mxu0 0.0
    %582 = vmatprep.subr.mxu0 0.0
    %583 = vmatpush1.msra.mxu0 0.0
    %584 = vmatprep.subr.mxu0 0.0
    %585 = vmatpush1.msra.mxu0 0.0
    %586 = vmatprep.subr.mxu0 0.0
    %587 = vmatpush1.msra.mxu0 0.0
    %588 = vmatprep.subr.mxu0 0.0
    %589 = vmatpush1.msra.mxu0 0.0
    %590 = vmatprep.subr.mxu0 0.0
    %591 = vmatpush1.msra.mxu0 0.0
    %592 = vmatprep.subr.mxu0 0.0
    %593 = vmatpush1.msra.mxu0 0.0
    %594 = vmatprep.mubr.f32.mxu0 0.0
    %595 = vmatmul.mubr.f32.gmra.mrb[0].mxu0 %v528
    %v596 = vpop.f32.mrb[0].mxu0
    %v597 = vadd.f32 0.0, %v596
    %v598 = vpop.f32.mrb[0].mxu0
    %599 = vdwg.mxu0
    %600 = vst [vmem:[#allocation8] sm:$0xff] %v524
    %601 = vst [vmem:[#allocation8 + $0x8] sm:$0xff] %v597
    // Predicated region
    $region22: #{tpu_custom_call.1} parent=1 // pred_check
      _
    $region23: #{tpu_custom_call.1} parent=1 // pred_check_branch
      %603 = sbr.rel (0) target = $region25
    $region24: #{tpu_custom_call.1} parent=1 // pred_region
      %s605 = ssub.s32 256, 256
      %606 = vsyncadd [#allocation5], %s605
      %s607 = sshll.u32 [#allocation8], 4
      %s608 = int_to_ptr.vmem [resolvable:$true] %s607
      %613 = dma.vmem_to_hbm [thread:$0]  %s608, 256, %s2, [#allocation5], 128, 128, 8
    $region25: #{tpu_custom_call.1} parent=1 // pred_fallthru
      _
    // Predicated region
    $region26: #{tpu_custom_call.1} parent=1 // pred_check
      _
    $region27: #{tpu_custom_call.1} parent=1 // pred_check_branch
      %615 = sbr.rel (0) target = $region29
    $region28: #{tpu_custom_call.1} parent=1 // pred_region
      %616 = dma.done [#allocation5], 256
    $region29: #{tpu_custom_call.1} parent=1 // pred_fallthru
      _
    %617 = vsyncpa [#allocation4], 1
    %618 = vsyncpa [#allocation7], 1
    %619 = vsyncpa [#allocation5], 1

</llo_original>
